<compile_context>
chip_gen: v5e
topology: v5e:2x2
jax: 0.10.0
libtpu: 0.0.40
codegen_flags: <defaults>
</compile_context>

<pallas_src>
import jax
import jax.numpy as jnp
from jax.experimental import pallas as pl
from jax.experimental.pallas import tpu as pltpu


def _round_up(x, m):
    return ((x + m - 1) // m) * m


def _critic_kernel(x_ref, att_ref, w1x_ref, w1a_ref, b1_ref, w2_ref,
                   out_ref, acc_ref):
    # Grid: (batch tiles, ndh tiles).  The ndh axis is the fc2 reduction.
    n = pl.program_id(1)

    @pl.when(n == 0)
    def _():
        acc_ref[...] = jnp.zeros_like(acc_ref)

    # fc1 tile: z1 = x @ w1_x[:, n] + att @ w1_a[:, n] + b1[n]   (f32 acc)
    z1 = jnp.dot(x_ref[...], w1x_ref[...], preferred_element_type=jnp.float32)
    z1 = z1 + jnp.dot(att_ref[...], w1a_ref[...],
                      preferred_element_type=jnp.float32)
    z1 = z1 + b1_ref[...]

    # LeakyReLU(0.2): one mul + one max (no cmp/select).
    a1 = jnp.maximum(z1, 0.2 * z1)

    # Partial fc2: (TB, TN) @ (TN, 128) — lane-dense (w2 zero-padded to 128
    # output columns); accumulated over the ndh tiles.
    acc_ref[...] += jnp.dot(a1.astype(w2_ref.dtype), w2_ref[...],
                            preferred_element_type=jnp.float32)

    @pl.when(n == pl.num_programs(1) - 1)
    def _():
        out_ref[...] = acc_ref[...].astype(out_ref.dtype)


def mlp_critic_forward(x, att, w1, b1, w2, b2, *,
                       compute_dtype=None, block_b=256, block_n=512):
    """MLP_CRITIC forward.

    x   : (B, resSize), att: (B, attSize)
    w1  : (resSize+attSize, ndh)  fc1 weight, transposed vs torch.nn.Linear
    b1  : (ndh,),  w2: (ndh, 1),  b2: (1,)
    compute_dtype : None (f32) or jnp.bfloat16 (bf16 streaming, f32 accum).
    Returns (B, 1) float32.
    """
    B, res_size = x.shape
    _, att_size = att.shape
    d_in, ndh = w1.shape
    assert d_in == res_size + att_size

    cdt = jnp.float32 if compute_dtype is None else compute_dtype
    sub = 8 if jnp.dtype(cdt).itemsize >= 4 else 16   # sublane multiple

    # ---- tile sizes & padded shapes ------------------------------------
    tb = _round_up(min(block_b, _round_up(B, sub)), sub)
    b_pad = _round_up(B, tb)
    kx = _round_up(res_size, 128)
    ka = _round_up(att_size, 128)
    tn = _round_up(min(block_n, _round_up(ndh, 128)), 128)
    ndh_pad = _round_up(ndh, tn)

    # ---- pad (zeros) & optionally cast operands ------------------------
    def _pad2(a, rows, cols, dtype):
        a = a.astype(dtype)
        pr, pc = rows - a.shape[0], cols - a.shape[1]
        if pr or pc:
            a = jnp.pad(a, ((0, pr), (0, pc)))
        return a

    x_p = _pad2(x, b_pad, kx, cdt)
    att_p = _pad2(att, b_pad, ka, cdt)
    w1x_p = _pad2(w1[:res_size], kx, ndh_pad, cdt)
    w1a_p = _pad2(w1[res_size:], ka, ndh_pad, cdt)
    b1_p = _pad2(b1.reshape(1, ndh), 1, ndh_pad, jnp.float32)
    # fc2 weight zero-padded to 128 output lanes -> lane-dense dot & stores.
    w2_p = _pad2(w2.reshape(ndh, 1), ndh_pad, 128, cdt)

    grid = (b_pad // tb, ndh_pad // tn)

    # rough VMEM footprint: double-buffered streams + resident scratch
    cb = jnp.dtype(cdt).itemsize
    footprint = 2 * (tb * kx * cb + tb * ka * cb + kx * tn * cb
                     + ka * tn * cb + tn * 4 + tn * 128 * cb + tb * 128 * 4)
    footprint += tb * 128 * 4
    vmem_limit = int(min(max(2 * footprint, 32 * 1024 * 1024),
                         48 * 1024 * 1024))

    out_padded = pl.pallas_call(
        _critic_kernel,
        out_shape=jax.ShapeDtypeStruct((b_pad, 128), jnp.float32),
        grid_spec=pltpu.PrefetchScalarGridSpec(
            num_scalar_prefetch=0,
            grid=grid,
            in_specs=[
                pl.BlockSpec((tb, kx), lambda b, n: (b, 0)),    # x
                pl.BlockSpec((tb, ka), lambda b, n: (b, 0)),    # att
                pl.BlockSpec((kx, tn), lambda b, n: (0, n)),    # w1_x
                pl.BlockSpec((ka, tn), lambda b, n: (0, n)),    # w1_a
                pl.BlockSpec((1, tn), lambda b, n: (0, n)),     # b1
                pl.BlockSpec((tn, 128), lambda b, n: (n, 0)),   # w2 (padded)
            ],
            out_specs=pl.BlockSpec((tb, 128), lambda b, n: (b, 0)),
            scratch_shapes=[pltpu.VMEM((tb, 128), jnp.float32)],
        ),
        compiler_params=pltpu.CompilerParams(
            dimension_semantics=("parallel", "arbitrary"),
            vmem_limit_bytes=vmem_limit,
        ),
    )(x_p, att_p, w1x_p, w1a_p, b1_p, w2_p)

    # b2 added here (no (1,1) VMEM block); slice the one real output column
    # out of the lane-dense (B_pad, 128) slab.
    return out_padded[:B, 0:1] + b2.reshape(1, 1).astype(jnp.float32)


def _reference(x, att, w1, b1, w2, b2, compute_dtype=None):
    cdt = jnp.float32 if compute_dtype is None else compute_dtype
    h = jnp.concatenate([x, att], axis=1).astype(cdt)
    z1 = jnp.dot(h, w1.astype(cdt),
                 preferred_element_type=jnp.float32) + b1
    a1 = jnp.where(z1 > 0, z1, 0.2 * z1)
    return jnp.dot(a1.astype(cdt), w2.astype(cdt),
                   preferred_element_type=jnp.float32) + b2


if __name__ == "__main__":
    # Small shapes consistent with the module (opt.resSize / attSize / ndh).
    B, res_size, att_size, ndh = 8, 32, 16, 32
    d_in = res_size + att_size

    key = jax.random.PRNGKey(0)
    k_x, k_a, k_w1, k_w2 = jax.random.split(key, 4)
    x = jax.random.normal(k_x, (B, res_size), dtype=jnp.float32)
    att = jax.random.normal(k_a, (B, att_size), dtype=jnp.float32)
    # weights_init: Linear weight ~ N(0, 0.02), bias = 0
    w1 = 0.02 * jax.random.normal(k_w1, (d_in, ndh), dtype=jnp.float32)
    b1 = jnp.zeros((ndh,), dtype=jnp.float32)
    w2 = 0.02 * jax.random.normal(k_w2, (ndh, 1), dtype=jnp.float32)
    b2 = jnp.zeros((1,), dtype=jnp.float32)

    # 1) f32 path.
    out = jax.block_until_ready(mlp_critic_forward(x, att, w1, b1, w2, b2))
    ref = _reference(x, att, w1, b1, w2, b2)
    assert out.shape == (B, 1)
    assert jnp.allclose(out, ref, atol=1e-5, rtol=1e-5)

    # 2) bf16 weight/activation streaming with f32 accumulation.
    out_bf = jax.block_until_ready(
        mlp_critic_forward(x, att, w1, b1, w2, b2, compute_dtype=jnp.bfloat16))
    ref_bf = _reference(x, att, w1, b1, w2, b2, compute_dtype=jnp.bfloat16)
    assert jnp.allclose(out_bf, ref_bf, atol=1e-3, rtol=5e-2)

    # 3) multi-tile grid (exercises batch-parallel axis + ndh-reduction
    #    accumulator / pl.when init-finalize path).
    B2, rs2, as2, nh2 = 24, 40, 24, 384
    keys2 = jax.random.split(jax.random.PRNGKey(1), 4)
    x2 = jax.random.normal(keys2[0], (B2, rs2), dtype=jnp.float32)
    a2 = jax.random.normal(keys2[1], (B2, as2), dtype=jnp.float32)
    w1_2 = 0.02 * jax.random.normal(keys2[2], (rs2 + as2, nh2), dtype=jnp.float32)
    b1_2 = jnp.zeros((nh2,), dtype=jnp.float32)
    w2_2 = 0.02 * jax.random.normal(keys2[3], (nh2, 1), dtype=jnp.float32)
    b2_2 = jnp.zeros((1,), dtype=jnp.float32)
    out2 = jax.block_until_ready(
        mlp_critic_forward(x2, a2, w1_2, b1_2, w2_2, b2_2,
                           block_b=8, block_n=128))
    ref2 = _reference(x2, a2, w1_2, b1_2, w2_2, b2_2)
    assert jnp.allclose(out2, ref2, atol=1e-5, rtol=1e-5)

    print("KERNEL_OK")
</pallas_src>

<mosaic_0001>
module attributes {stable_mosaic.version = 11 : i64} {
  func.func @_critic_kernel(%arg0: i32, %arg1: i32, %arg2: memref<8x128xf32, #tpu.memory_space<vmem>>, %arg3: memref<8x128xf32, #tpu.memory_space<vmem>>, %arg4: memref<128x128xf32, #tpu.memory_space<vmem>>, %arg5: memref<128x128xf32, #tpu.memory_space<vmem>>, %arg6: memref<1x128xf32, #tpu.memory_space<vmem>>, %arg7: memref<128x128xf32, #tpu.memory_space<vmem>>, %arg8: memref<8x128xf32, #tpu.memory_space<vmem>>, %arg9: memref<8x128xf32, #tpu.memory_space<vmem>>) attributes {dimension_semantics = [#tpu.dimension_semantics<parallel>, #tpu.dimension_semantics<arbitrary>], iteration_bounds = array<i64: 1, 1>, scalar_prefetch = 0 : i64, scratch_operands = 1 : i64, tpu.core_type = #tpu.core_type<tc>, window_params = [{transform_indices = @transform_0, window_bounds = array<i64: 8, 128>}, {transform_indices = @transform_1, window_bounds = array<i64: 8, 128>}, {transform_indices = @transform_2, window_bounds = array<i64: 128, 128>}, {transform_indices = @transform_3, window_bounds = array<i64: 128, 128>}, {transform_indices = @transform_4, window_bounds = array<i64: 1, 128>}, {transform_indices = @transform_5, window_bounds = array<i64: 128, 128>}, {transform_indices = @transform_6, window_bounds = array<i64: 8, 128>}]} {
    %c0_i32 = arith.constant 0 : i32
    %0 = arith.cmpi eq, %arg1, %c0_i32 : i32
    %1 = arith.extui %0 : i1 to i32
    %c0_i32_0 = arith.constant 0 : i32
    %2 = arith.cmpi ne, %1, %c0_i32_0 : i32
    scf.if %2 {
      %cst_21 = arith.constant 0.000000e+00 : f32
      %24 = vector.broadcast %cst_21 : f32 to vector<8x128xf32>
      %c0_22 = arith.constant 0 : index
      %c0_23 = arith.constant 0 : index
      %25 = vector.load %arg9[%c0_22, %c0_23] : memref<8x128xf32, #tpu.memory_space<vmem>>, vector<8x128xf32>
      tpu.vector_store %arg9[%c0_22, %c0_23], %24 {strides = array<i32>} : memref<8x128xf32, #tpu.memory_space<vmem>>, vector<8x128xf32>,
    } else {
    }
    %c0 = arith.constant 0 : index
    %c0_1 = arith.constant 0 : index
    %3 = vector.load %arg2[%c0, %c0_1] : memref<8x128xf32, #tpu.memory_space<vmem>>, vector<8x128xf32>
    %c0_2 = arith.constant 0 : index
    %c0_3 = arith.constant 0 : index
    %4 = vector.load %arg4[%c0_2, %c0_3] : memref<128x128xf32, #tpu.memory_space<vmem>>, vector<128x128xf32>
    %cst = arith.constant dense<0.000000e+00> : vector<8x128xf32>
    %5 = tpu.matmul %3, %4, %cst {dimension_numbers = #tpu.dot_dimension_numbers<[1], [0], [0], [1], [0, 0, 1, 1], [], []>} : vector<8x128xf32>, vector<128x128xf32>, vector<8x128xf32> -> vector<8x128xf32>
    %c0_4 = arith.constant 0 : index
    %c0_5 = arith.constant 0 : index
    %6 = vector.load %arg3[%c0_4, %c0_5] : memref<8x128xf32, #tpu.memory_space<vmem>>, vector<8x128xf32>
    %c0_6 = arith.constant 0 : index
    %c0_7 = arith.constant 0 : index
    %7 = vector.load %arg5[%c0_6, %c0_7] : memref<128x128xf32, #tpu.memory_space<vmem>>, vector<128x128xf32>
    %cst_8 = arith.constant dense<0.000000e+00> : vector<8x128xf32>
    %8 = tpu.matmul %6, %7, %cst_8 {dimension_numbers = #tpu.dot_dimension_numbers<[1], [0], [0], [1], [0, 0, 1, 1], [], []>} : vector<8x128xf32>, vector<128x128xf32>, vector<8x128xf32> -> vector<8x128xf32>
    %9 = arith.addf %5, %8 : vector<8x128xf32>
    %c0_9 = arith.constant 0 : index
    %c0_10 = arith.constant 0 : index
    %10 = vector.load %arg6[%c0_9, %c0_10] : memref<1x128xf32, #tpu.memory_space<vmem>>, vector<1x128xf32>
    %11 = vector.broadcast %10 : vector<1x128xf32> to vector<8x128xf32>
    %12 = arith.addf %9, %11 : vector<8x128xf32>
    %cst_11 = arith.constant 2.000000e-01 : f32
    %13 = vector.broadcast %cst_11 : f32 to vector<8x128xf32>
    %14 = arith.mulf %13, %12 : vector<8x128xf32>
    %15 = arith.maximumf %12, %14 : vector<8x128xf32>
    %c0_12 = arith.constant 0 : index
    %c0_13 = arith.constant 0 : index
    %16 = vector.load %arg9[%c0_12, %c0_13] : memref<8x128xf32, #tpu.memory_space<vmem>>, vector<8x128xf32>
    %c0_14 = arith.constant 0 : index
    %c0_15 = arith.constant 0 : index
    %17 = vector.load %arg7[%c0_14, %c0_15] : memref<128x128xf32, #tpu.memory_space<vmem>>, vector<128x128xf32>
    %cst_16 = arith.constant dense<0.000000e+00> : vector<8x128xf32>
    %18 = tpu.matmul %15, %17, %cst_16 {dimension_numbers = #tpu.dot_dimension_numbers<[1], [0], [0], [1], [0, 0, 1, 1], [], []>} : vector<8x128xf32>, vector<128x128xf32>, vector<8x128xf32> -> vector<8x128xf32>
    %19 = arith.addf %16, %18 : vector<8x128xf32>
    %c0_17 = arith.constant 0 : index
    %c0_18 = arith.constant 0 : index
    %20 = vector.load %arg9[%c0_17, %c0_18] : memref<8x128xf32, #tpu.memory_space<vmem>>, vector<8x128xf32>
    tpu.vector_store %arg9[%c0_17, %c0_18], %19 {strides = array<i32>} : memref<8x128xf32, #tpu.memory_space<vmem>>, vector<8x128xf32>,
    %c0_i32_19 = arith.constant 0 : i32
    %21 = arith.cmpi eq, %arg1, %c0_i32_19 : i32
    %22 = arith.extui %21 : i1 to i32
    %c0_i32_20 = arith.constant 0 : i32
    %23 = arith.cmpi ne, %22, %c0_i32_20 : i32
    scf.if %23 {
      %c0_21 = arith.constant 0 : index
      %c0_22 = arith.constant 0 : index
      %24 = vector.load %arg9[%c0_21, %c0_22] : memref<8x128xf32, #tpu.memory_space<vmem>>, vector<8x128xf32>
      %c0_23 = arith.constant 0 : index
      %c0_24 = arith.constant 0 : index
      %25 = vector.load %arg8[%c0_23, %c0_24] : memref<8x128xf32, #tpu.memory_space<vmem>>, vector<8x128xf32>
      tpu.vector_store %arg8[%c0_23, %c0_24], %24 {strides = array<i32>} : memref<8x128xf32, #tpu.memory_space<vmem>>, vector<8x128xf32>,
    } else {
    }
    return
  }
  func.func @transform_0(%arg0: i32, %arg1: i32) -> (i32, i32) {
    %c0_i32 = arith.constant 0 : i32
    %c0_i32_0 = arith.constant 0 : i32
    return %arg0, %c0_i32 : i32, i32
  }
  func.func @transform_1(%arg0: i32, %arg1: i32) -> (i32, i32) {
    %c0_i32 = arith.constant 0 : i32
    %c0_i32_0 = arith.constant 0 : i32
    return %arg0, %c0_i32 : i32, i32
  }
  func.func @transform_2(%arg0: i32, %arg1: i32) -> (i32, i32) {
    %c0_i32 = arith.constant 0 : i32
    %c0_i32_0 = arith.constant 0 : i32
    return %c0_i32, %arg1 : i32, i32
  }
  func.func @transform_3(%arg0: i32, %arg1: i32) -> (i32, i32) {
    %c0_i32 = arith.constant 0 : i32
    %c0_i32_0 = arith.constant 0 : i32
    return %c0_i32, %arg1 : i32, i32
  }
  func.func @transform_4(%arg0: i32, %arg1: i32) -> (i32, i32) {
    %c0_i32 = arith.constant 0 : i32
    %c0_i32_0 = arith.constant 0 : i32
    return %c0_i32, %arg1 : i32, i32
  }
  func.func @transform_5(%arg0: i32, %arg1: i32) -> (i32, i32) {
    %c0_i32 = arith.constant 0 : i32
    %c0_i32_0 = arith.constant 0 : i32
    return %arg1, %c0_i32 : i32, i32
  }
  func.func @transform_6(%arg0: i32, %arg1: i32) -> (i32, i32) {
    %c0_i32 = arith.constant 0 : i32
    %c0_i32_0 = arith.constant 0 : i32
    return %arg0, %c0_i32 : i32, i32
  }
}

</mosaic_0001>

<llo_original>
// kernel: tpu_custom_call.1
$region0: #{tpu_custom_call.1}
  #allocation0 [shape = 'u32[]', space=smem, size = 0x4, offset = 0x4, fixed_abs, tag = 'smem constant byte address 0x4 - core index']
  #allocation1 [shape = 'u32[72,128]{1,0:T(1,128)}', space=vmem, size = 0x9000, scoped, tag = 'internal scratch']
  #allocation2 [shape = 'f32[8,128]{1,0:T(8,128)}', space=vmem, size = 0x1000, scoped, tag = 'scratch operand']
  %s0 = inlined_call_operand.hbm [shape: f32[8,128], index: 0, kind: input, shape index: {}]
  %s1 = inlined_call_operand.hbm [shape: f32[8,128], index: 1, kind: input, shape index: {}]
  %s2 = inlined_call_operand.hbm [shape: f32[128,128], index: 2, kind: input, shape index: {}]
  %s3 = inlined_call_operand.hbm [shape: f32[128,128], index: 3, kind: input, shape index: {}]
  %s4 = inlined_call_operand.vmem [shape: f32[1,128], index: 4, kind: input, shape index: {}]
  %s5 = inlined_call_operand.hbm [shape: f32[128,128], index: 5, kind: input, shape index: {}]
  %s6 = inlined_call_operand.hbm [shape: f32[8,128], index: 6, kind: output, shape index: {}]
  %s7 = sld [smem:[#allocation0]]
  $region62: #{tpu_custom_call.1} parent=0
    _
  %s9 = ssub.s32 1, %s7
  %s10 = scalar_select 0, %s9, %s7
  $region1: #{tpu_custom_call.1} parent=0
    #allocation3 [shape = 'u8[4096]{0}', space=vmem, size = 0x1000, scoped, tag = 'input window, operand 0, single buffered']
    #allocation4 [shape = 's32[1]{0}', space=sflag, size = 0x4, scoped, tag = 'scoped memory for tpu_custom_call.1']
    #allocation5 [shape = 's32[1]{0}', space=sflag, size = 0x4, scoped, tag = 'scoped memory for tpu_custom_call.1']
    #allocation6 [shape = 'u8[4096]{0}', space=vmem, size = 0x1000, scoped, tag = 'input window, operand 1, single buffered']
    #allocation7 [shape = 's32[1]{0}', space=sflag, size = 0x4, scoped, tag = 'scoped memory for tpu_custom_call.1']
    #allocation8 [shape = 'u8[65536]{0}', space=vmem, size = 0x10000, scoped, tag = 'input window, operand 2, single buffered']
    #allocation9 [shape = 'u8[65536]{0}', space=vmem, size = 0x10000, scoped, tag = 'input window, operand 3, single buffered']
    #allocation10 [shape = 's32[1]{0}', space=sflag, size = 0x4, scoped, tag = 'scoped memory for tpu_custom_call.1']
    #allocation11 [shape = 'u8[65536]{0}', space=vmem, size = 0x10000, scoped, tag = 'input window, operand 5, single buffered']
    #allocation12 [shape = 'u8[4096]{0}', space=vmem, size = 0x1000, scoped, tag = 'output window, operand 0, single buffered']
    %11 = vsyncpa [#allocation4], 0
    %12 = vsyncpa [#allocation7], 0
    %13 = vsyncpa [#allocation10], 0
    %14 = vsyncpa [#allocation5], 0
    // Predicated region
    $region2: #{tpu_custom_call.1} parent=1 // pred_check
      _
    $region3: #{tpu_custom_call.1} parent=1 // pred_check_branch
      %16 = sbr.rel (0) target = $region5
    $region4: #{tpu_custom_call.1} parent=1 // pred_region
      %18 = vsyncadd [#allocation4], 0
      %s20 = sshll.u32 %s0, 4
      %s21 = int_to_ptr.hbm [resolvable:$true] %s20
      %s22 = sshll.u32 [#allocation3], 4
      %s23 = int_to_ptr.vmem [resolvable:$true] %s22
      %25 = dma.hbm_to_vmem [thread:$0]  %s21, 128, %s23, [#allocation4]
    $region5: #{tpu_custom_call.1} parent=1 // pred_fallthru
      _
    // Predicated region
    $region6: #{tpu_custom_call.1} parent=1 // pred_check
      _
    $region7: #{tpu_custom_call.1} parent=1 // pred_check_branch
      %27 = sbr.rel (0) target = $region9
    $region8: #{tpu_custom_call.1} parent=1 // pred_region
      %29 = vsyncadd [#allocation7], 0
      %s31 = sshll.u32 %s1, 4
      %s32 = int_to_ptr.hbm [resolvable:$true] %s31
      %s33 = sshll.u32 [#allocation6], 4
      %s34 = int_to_ptr.vmem [resolvable:$true] %s33
      %36 = dma.hbm_to_vmem [thread:$0]  %s32, 128, %s34, [#allocation7]
    $region9: #{tpu_custom_call.1} parent=1 // pred_fallthru
      _
    // Predicated region
    $region10: #{tpu_custom_call.1} parent=1 // pred_check
      _
    $region11: #{tpu_custom_call.1} parent=1 // pred_check_branch
      %38 = sbr.rel (0) target = $region13
    $region12: #{tpu_custom_call.1} parent=1 // pred_region
      %40 = vsyncadd [#allocation7], 0
      %s41 = sshll.u32 %s2, 4
      %s42 = int_to_ptr.hbm [resolvable:$true] %s41
      %s43 = sshll.u32 [#allocation8], 4
      %s44 = int_to_ptr.vmem [resolvable:$true] %s43
      %49 = dma.hbm_to_vmem [thread:$0]  %s42, 2048, %s44, [#allocation7], 128, 128, 8
    $region13: #{tpu_custom_call.1} parent=1 // pred_fallthru
      _
    // Predicated region
    $region14: #{tpu_custom_call.1} parent=1 // pred_check
      _
    $region15: #{tpu_custom_call.1} parent=1 // pred_check_branch
      %51 = sbr.rel (0) target = $region17
    $region16: #{tpu_custom_call.1} parent=1 // pred_region
      %53 = vsyncadd [#allocation10], 0
      %s54 = sshll.u32 %s3, 4
      %s55 = int_to_ptr.hbm [resolvable:$true] %s54
      %s56 = sshll.u32 [#allocation9], 4
      %s57 = int_to_ptr.vmem [resolvable:$true] %s56
      %62 = dma.hbm_to_vmem [thread:$0]  %s55, 2048, %s57, [#allocation10], 128, 128, 8
    $region17: #{tpu_custom_call.1} parent=1 // pred_fallthru
      _
    // Predicated region
    $region18: #{tpu_custom_call.1} parent=1 // pred_check
      _
    $region19: #{tpu_custom_call.1} parent=1 // pred_check_branch
      %64 = sbr.rel (0) target = $region21
    $region20: #{tpu_custom_call.1} parent=1 // pred_region
      _
    $region21: #{tpu_custom_call.1} parent=1 // pred_fallthru
      _
    // Predicated region
    $region22: #{tpu_custom_call.1} parent=1 // pred_check
      _
    $region23: #{tpu_custom_call.1} parent=1 // pred_check_branch
      %66 = sbr.rel (0) target = $region25
    $region24: #{tpu_custom_call.1} parent=1 // pred_region
      %68 = vsyncadd [#allocation10], 0
      %s69 = sshll.u32 %s5, 4
      %s70 = int_to_ptr.hbm [resolvable:$true] %s69
      %s71 = sshll.u32 [#allocation11], 4
      %s72 = int_to_ptr.vmem [resolvable:$true] %s71
      %77 = dma.hbm_to_vmem [thread:$0]  %s70, 2048, %s72, [#allocation10], 128, 128, 8
    $region25: #{tpu_custom_call.1} parent=1 // pred_fallthru
      _
    // Predicated region
    $region26: #{tpu_custom_call.1} parent=1 // pred_check
      _
    $region27: #{tpu_custom_call.1} parent=1 // pred_check_branch
      %79 = sbr.rel (0) target = $region29
    $region28: #{tpu_custom_call.1} parent=1 // pred_region
      %81 = dma.done [#allocation4], 128
    $region29: #{tpu_custom_call.1} parent=1 // pred_fallthru
      _
    // Predicated region
    $region30: #{tpu_custom_call.1} parent=1 // pred_check
      _
    $region31: #{tpu_custom_call.1} parent=1 // pred_check_branch
      %83 = sbr.rel (0) target = $region33
    $region32: #{tpu_custom_call.1} parent=1 // pred_region
      %85 = dma.done [#allocation7], 128
    $region33: #{tpu_custom_call.1} parent=1 // pred_fallthru
      _
    // Predicated region
    $region34: #{tpu_custom_call.1} parent=1 // pred_check
      _
    $region35: #{tpu_custom_call.1} parent=1 // pred_check_branch
      %87 = sbr.rel (0) target = $region37
    $region36: #{tpu_custom_call.1} parent=1 // pred_region
      %89 = dma.done [#allocation7], 2048
    $region37: #{tpu_custom_call.1} parent=1 // pred_fallthru
      _
    // Predicated region
    $region38: #{tpu_custom_call.1} parent=1 // pred_check
      _
    $region39: #{tpu_custom_call.1} parent=1 // pred_check_branch
      %91 = sbr.rel (0) target = $region41
    $region40: #{tpu_custom_call.1} parent=1 // pred_region
      %93 = dma.done [#allocation10], 2048
    $region41: #{tpu_custom_call.1} parent=1 // pred_fallthru
      _
    // Predicated region
    $region42: #{tpu_custom_call.1} parent=1 // pred_check
      _
    $region43: #{tpu_custom_call.1} parent=1 // pred_check_branch
      %95 = sbr.rel (0) target = $region45
    $region44: #{tpu_custom_call.1} parent=1 // pred_region
      %97 = dma.done [#allocation10], 2048
    $region45: #{tpu_custom_call.1} parent=1 // pred_fallthru
      _
    %p98 = scmp.eq.s32.totalorder 0, 0
    // Predicated region
    $region46: #{tpu_custom_call.1} parent=1 // pred_check
      %p99 = pneg %p98
    $region47: #{tpu_custom_call.1} parent=1 // pred_check_branch
      %101 = sbr.rel (%p99) target = $region49
    $region48: #{tpu_custom_call.1} parent=1 // pred_region
      %102 = vst [vmem:[#allocation2] sm:$0xff] 0.0
    $region49: #{tpu_custom_call.1} parent=1 // pred_fallthru
      _
    %v103 = vld [vmem:[#allocation3] sm:$0xff]
    %v104 = vld [vmem:[#allocation8] sm:$0xff]
    %v105 = vld [vmem:[#allocation8 + $0x8] sm:$0xff]
    %v106 = vld [vmem:[#allocation8 + $0x10] sm:$0xff]
    %v107 = vld [vmem:[#allocation8 + $0x18] sm:$0xff]
    %v108 = vld [vmem:[#allocation8 + $0x20] sm:$0xff]
    %v109 = vld [vmem:[#allocation8 + $0x28] sm:$0xff]
    %v110 = vld [vmem:[#allocation8 + $0x30] sm:$0xff]
    %v111 = vld [vmem:[#allocation8 + $0x38] sm:$0xff]
    %v112 = vld [vmem:[#allocation8 + $0x40] sm:$0xff]
    %v113 = vld [vmem:[#allocation8 + $0x48] sm:$0xff]
    %v114 = vld [vmem:[#allocation8 + $0x50] sm:$0xff]
    %v115 = vld [vmem:[#allocation8 + $0x58] sm:$0xff]
    %v116 = vld [vmem:[#allocation8 + $0x60] sm:$0xff]
    %v117 = vld [vmem:[#allocation8 + $0x68] sm:$0xff]
    %v118 = vld [vmem:[#allocation8 + $0x70] sm:$0xff]
    %v119 = vld [vmem:[#allocation8 + $0x78] sm:$0xff]
    %v120 = vld [vmem:[#allocation6] sm:$0xff]
    %v121 = vld [vmem:[#allocation9] sm:$0xff]
    %v122 = vld [vmem:[#allocation9 + $0x8] sm:$0xff]
    %v123 = vld [vmem:[#allocation9 + $0x10] sm:$0xff]
    %v124 = vld [vmem:[#allocation9 + $0x18] sm:$0xff]
    %v125 = vld [vmem:[#allocation9 + $0x20] sm:$0xff]
    %v126 = vld [vmem:[#allocation9 + $0x28] sm:$0xff]
    %v127 = vld [vmem:[#allocation9 + $0x30] sm:$0xff]
    %v128 = vld [vmem:[#allocation9 + $0x38] sm:$0xff]
    %v129 = vld [vmem:[#allocation9 + $0x40] sm:$0xff]
    %v130 = vld [vmem:[#allocation9 + $0x48] sm:$0xff]
    %v131 = vld [vmem:[#allocation9 + $0x50] sm:$0xff]
    %v132 = vld [vmem:[#allocation9 + $0x58] sm:$0xff]
    %v133 = vld [vmem:[#allocation9 + $0x60] sm:$0xff]
    %v134 = vld [vmem:[#allocation9 + $0x68] sm:$0xff]
    %v135 = vld [vmem:[#allocation9 + $0x70] sm:$0xff]
    %v136 = vld [vmem:[#allocation9 + $0x78] sm:$0xff]
    %137 = vmatpush.msra.mxu0 %v136
    %138 = vmatpush.msra.mxu0 %v135
    %139 = vmatpush.msra.mxu0 %v134
    %140 = vmatpush.msra.mxu0 %v133
    %141 = vmatpush.msra.mxu0 %v132
    %142 = vmatpush.msra.mxu0 %v131
    %143 = vmatpush.msra.mxu0 %v130
    %144 = vmatpush.msra.mxu0 %v129
    %145 = vmatpush.msra.mxu0 %v128
    %146 = vmatpush.msra.mxu0 %v127
    %147 = vmatpush.msra.mxu0 %v126
    %148 = vmatpush.msra.mxu0 %v125
    %149 = vmatpush.msra.mxu0 %v124
    %150 = vmatpush.msra.mxu0 %v123
    %151 = vmatpush.msra.mxu0 %v122
    %152 = vmatpush.msra.mxu0 %v121
    %153 = vmatmul.f32.gmra.mxu0 %v120
    %v154 = vpop.f32.mrf.mxu0
    %v155 = vadd.f32 0.0, %v154
    %156 = vdwg.mxu0
    %157 = vmatpush.msra.mxu0 %v119
    %158 = vmatpush.msra.mxu0 %v118
    %159 = vmatpush.msra.mxu0 %v117
    %160 = vmatpush.msra.mxu0 %v116
    %161 = vmatpush.msra.mxu0 %v115
    %162 = vmatpush.msra.mxu0 %v114
    %163 = vmatpush.msra.mxu0 %v113
    %164 = vmatpush.msra.mxu0 %v112
    %165 = vmatpush.msra.mxu0 %v111
    %166 = vmatpush.msra.mxu0 %v110
    %167 = vmatpush.msra.mxu0 %v109
    %168 = vmatpush.msra.mxu0 %v108
    %169 = vmatpush.msra.mxu0 %v107
    %170 = vmatpush.msra.mxu0 %v106
    %171 = vmatpush.msra.mxu0 %v105
    %172 = vmatpush.msra.mxu0 %v104
    %173 = vmatmul.f32.gmra.mxu0 %v103
    %v174 = vpop.f32.mrf.mxu0
    %v175 = vadd.f32 %v155, %v174
    %176 = vdwg.mxu0
    %v177 = vld [vmem:[%s4] sm:$0x1]
    %v179 = vperm.slane %v177, 0
    %v181 = vadd.f32 %v175, %v179
    %v182 = vmul.f32 %v181, 0.2
    %v183 = vmax.f32 %v181, %v182
    %v184 = vld [vmem:[#allocation2] sm:$0xff]
    %v185 = vld [vmem:[#allocation11] sm:$0xff]
    %v186 = vld [vmem:[#allocation11 + $0x8] sm:$0xff]
    %v187 = vld [vmem:[#allocation11 + $0x10] sm:$0xff]
    %v188 = vld [vmem:[#allocation11 + $0x18] sm:$0xff]
    %v189 = vld [vmem:[#allocation11 + $0x20] sm:$0xff]
    %v190 = vld [vmem:[#allocation11 + $0x28] sm:$0xff]
    %v191 = vld [vmem:[#allocation11 + $0x30] sm:$0xff]
    %v192 = vld [vmem:[#allocation11 + $0x38] sm:$0xff]
    %v193 = vld [vmem:[#allocation11 + $0x40] sm:$0xff]
    %v194 = vld [vmem:[#allocation11 + $0x48] sm:$0xff]
    %v195 = vld [vmem:[#allocation11 + $0x50] sm:$0xff]
    %v196 = vld [vmem:[#allocation11 + $0x58] sm:$0xff]
    %v197 = vld [vmem:[#allocation11 + $0x60] sm:$0xff]
    %v198 = vld [vmem:[#allocation11 + $0x68] sm:$0xff]
    %v199 = vld [vmem:[#allocation11 + $0x70] sm:$0xff]
    %v200 = vld [vmem:[#allocation11 + $0x78] sm:$0xff]
    %201 = vmatpush.msra.mxu0 %v200
    %202 = vmatpush.msra.mxu0 %v199
    %203 = vmatpush.msra.mxu0 %v198
    %204 = vmatpush.msra.mxu0 %v197
    %205 = vmatpush.msra.mxu0 %v196
    %206 = vmatpush.msra.mxu0 %v195
    %207 = vmatpush.msra.mxu0 %v194
    %208 = vmatpush.msra.mxu0 %v193
    %209 = vmatpush.msra.mxu0 %v192
    %210 = vmatpush.msra.mxu0 %v191
    %211 = vmatpush.msra.mxu0 %v190
    %212 = vmatpush.msra.mxu0 %v189
    %213 = vmatpush.msra.mxu0 %v188
    %214 = vmatpush.msra.mxu0 %v187
    %215 = vmatpush.msra.mxu0 %v186
    %216 = vmatpush.msra.mxu0 %v185
    %217 = vmatmul.f32.gmra.mxu0 %v183
    %v218 = vpop.f32.mrf.mxu0
    %v219 = vadd.f32 0.0, %v218
    %220 = vdwg.mxu0
    %v221 = vadd.f32 %v184, %v219
    %222 = vst [vmem:[#allocation2] sm:$0xff] %v221
    // Predicated region
    $region50: #{tpu_custom_call.1} parent=1 // pred_check
      %p223 = pneg %p98
    $region51: #{tpu_custom_call.1} parent=1 // pred_check_branch
      %225 = sbr.rel (%p223) target = $region53
    $region52: #{tpu_custom_call.1} parent=1 // pred_region
      %v226 = vld [vmem:[#allocation2] sm:$0xff]
      %227 = vst [vmem:[#allocation12] sm:$0xff] %v226
    $region53: #{tpu_custom_call.1} parent=1 // pred_fallthru
      _
    // Predicated region
    $region54: #{tpu_custom_call.1} parent=1 // pred_check
      _
    $region55: #{tpu_custom_call.1} parent=1 // pred_check_branch
      %229 = sbr.rel (0) target = $region57
    $region56: #{tpu_custom_call.1} parent=1 // pred_region
      %231 = vsyncadd [#allocation5], 0
      %s233 = sshll.u32 [#allocation12], 4
      %s234 = int_to_ptr.vmem [resolvable:$true] %s233
      %s235 = sshll.u32 %s6, 4
      %s236 = int_to_ptr.hbm [resolvable:$true] %s235
      %238 = dma.vmem_to_hbm [thread:$0]  %s234, 128, %s236, [#allocation5]
    $region57: #{tpu_custom_call.1} parent=1 // pred_fallthru
      _
    // Predicated region
    $region58: #{tpu_custom_call.1} parent=1 // pred_check
      _
    $region59: #{tpu_custom_call.1} parent=1 // pred_check_branch
      %240 = sbr.rel (0) target = $region61
    $region60: #{tpu_custom_call.1} parent=1 // pred_region
      %242 = dma.done [#allocation5], 128
    $region61: #{tpu_custom_call.1} parent=1 // pred_fallthru
      _
    %243 = vsyncpa [#allocation4], 1
    %244 = vsyncpa [#allocation7], 1
    %245 = vsyncpa [#allocation10], 1
    %246 = vsyncpa [#allocation5], 1

</llo_original>
